<compile_context>
chip_gen: v7x
topology: tpu7x:2x2x1
jax: 0.10.0
libtpu: 0.0.40
codegen_flags: <defaults>
</compile_context>

<pallas_src>
import functools

import jax
import jax.numpy as jnp
from jax import lax
from jax.experimental import pallas as pl
from jax.experimental.pallas import tpu as pltpu

LANE = 128
SUBLANE = 8
# (8192, 128) f32 tile = 4 MiB/input/buffer -> ~16 MiB with default double
# buffering; fits the explicit 32 MiB scoped-VMEM limit below on every generation
# (v5e/v6e: 128 MiB physical VMEM, v7x: 64 MiB physical).
MAX_ROW_TILE = 8192
VMEM_LIMIT_BYTES = 32 * 1024 * 1024
# Leading "parallel" grid axis: shards the HBM-bandwidth-bound reduction across the
# two TensorCores on v7x; on single-TC chips (v5e/v6e) the slices simply run
# sequentially at negligible extra cost.
NUM_CORE_SLICES = 2


def _round_up(x, m):
    return ((x + m - 1) // m) * m


def _dice_reduce_kernel(x_ref, t_ref, o_ref, acc_ref, *,
                        rows_total, row_tile, steps_per_core, needs_mask):
    """Accumulate [dot(x,t), sum(x), sum(t), sum|x-t|] over this core-slice's rows.

    Steady state is vld + VPU only: per-step partials live in four (8, 128) VMEM
    accumulators.  Masking of partial/ghost blocks is gated with pl.when so it only
    costs VALU ops on the (at most one per core slice) block that needs it, and the
    final cross-lane reduce is deferred to the wrapper.
    """
    c = pl.program_id(0)           # core-slice index (parallel axis)
    i = pl.program_id(1)           # streaming step within this slice (arbitrary axis)
    nsteps = pl.num_programs(1)

    @pl.when(i == 0)
    def _():
        acc_ref[...] = jnp.zeros_like(acc_ref)

    nsub = row_tile // SUBLANE

    def accumulate(x, t):
        prod = x * t
        adiff = jnp.abs(x - t)

        def part(v):
            # (row_tile, 128) -> (row_tile//8, 8, 128); summing the major axis is
            # pure vreg adds on the VPU (no per-step XLU work).
            return v.reshape(nsub, SUBLANE, LANE).sum(axis=0)

        acc_ref[0] += part(prod)
        acc_ref[1] += part(x)
        acc_ref[2] += part(t)
        acc_ref[3] += part(adiff)

    x = x_ref[...].astype(jnp.float32)   # per-tile upcast in VMEM; inputs keep their
    t = t_ref[...].astype(jnp.float32)   # original (possibly narrower) dtype over HBM

    if not needs_mask:
        # Common case (rows evenly tiled, no ghost blocks): no masking ops compiled
        # in at all -- steady state is pure vld + mul/sub/abs/add.
        accumulate(x, t)
    else:
        g = c * steps_per_core + i                      # global block index (may be a ghost)
        block_is_full = (g + 1) * row_tile <= rows_total

        @pl.when(block_is_full)
        def _():
            accumulate(x, t)

        @pl.when(jnp.logical_not(block_is_full))
        def _():
            # Partial or ghost block: mask rows past the true end BEFORE any
            # arithmetic so garbage VMEM (incl. NaN/Inf) cannot propagate.
            row_ids = g * row_tile + lax.broadcasted_iota(jnp.int32, x.shape, 0)
            valid = row_ids < rows_total
            zero = jnp.float32(0.0)
            accumulate(jnp.where(valid, x, zero), jnp.where(valid, t, zero))

    @pl.when(i == nsteps - 1)
    def _():
        # Emit raw per-core-slice partial accumulators; the tiny cross-lane/sublane
        # reduction (num_slices*4*8*128 f32) is a fused XLA op in the wrapper.
        o_ref[0] = acc_ref[...]


def _dice_sums_2d(x2d, t2d, rows, row_tile):
    nblocks = (rows + row_tile - 1) // row_tile
    num_slices = min(NUM_CORE_SLICES, nblocks)
    steps_per_core = (nblocks + num_slices - 1) // num_slices
    needs_mask = (rows % row_tile != 0) or (num_slices * steps_per_core != nblocks)

    def in_index_map(c, i):
        # Clamp ghost blocks (when nblocks doesn't split evenly across the core
        # slices) onto the last real block; their contribution is masked to zero
        # in-kernel, and the clamp keeps the auto-DMA in bounds.
        g = c * steps_per_core + i
        return (jnp.minimum(g, nblocks - 1), 0)

    kernel = functools.partial(
        _dice_reduce_kernel, rows_total=rows, row_tile=row_tile,
        steps_per_core=steps_per_core, needs_mask=needs_mask)

    partials = pl.pallas_call(
        kernel,
        out_shape=jax.ShapeDtypeStruct((num_slices, 4, SUBLANE, LANE), jnp.float32),
        grid_spec=pltpu.PrefetchScalarGridSpec(
            num_scalar_prefetch=0,
            grid=(num_slices, steps_per_core),
            in_specs=[
                pl.BlockSpec((row_tile, LANE), in_index_map),
                pl.BlockSpec((row_tile, LANE), in_index_map),
            ],
            out_specs=pl.BlockSpec((1, 4, SUBLANE, LANE),
                                   lambda c, i: (c, 0, 0, 0)),
            scratch_shapes=[pltpu.VMEM((4, SUBLANE, LANE), jnp.float32)],
        ),
        compiler_params=pltpu.CompilerParams(
            dimension_semantics=("parallel", "arbitrary"),
            vmem_limit_bytes=VMEM_LIMIT_BYTES,
        ),
    )(x2d, t2d)
    # -> [dot(x,t), sum(x), sum(t), sum|x-t|]
    return jnp.sum(partials, axis=(0, 2, 3))


@jax.jit
def _dice_sums(input_, target):
    # Flatten only (no dtype cast, no full-array pad copy).  Callers may pass
    # narrower dtypes (bf16 activations, bf16/int8 {0,1} targets) to halve HBM
    # traffic: the kernel upcasts per tile in VMEM and accumulates in f32.
    iflat = input_.reshape(-1)
    tflat = target.reshape(-1)
    n = iflat.shape[0]

    n_main = (n // LANE) * LANE          # lane-aligned body
    rows = n_main // LANE

    sums = jnp.zeros((4,), jnp.float32)

    if rows > 0:
        if n_main == n:
            xb, tb = iflat, tflat        # pure reshape of contiguous data: free
        else:
            # TODO(synk): mask the final partial row's lanes in-kernel instead of
            # slicing here; the slice materializes an HBM copy of the body for both
            # inputs whenever n % 128 != 0 (not hit by the common/test shapes).
            xb, tb = iflat[:n_main], tflat[:n_main]
        row_tile = min(MAX_ROW_TILE, _round_up(rows, SUBLANE))
        sums = sums + _dice_sums_2d(
            xb.reshape(rows, LANE), tb.reshape(rows, LANE), rows, row_tile)

    if n_main != n:
        # < 128-element tail (rare): trivial jnp reduction in the wrapper.
        xt = iflat[n_main:].astype(jnp.float32)
        tt = tflat[n_main:].astype(jnp.float32)
        tail = jnp.stack([jnp.sum(xt * tt), jnp.sum(xt), jnp.sum(tt),
                          jnp.sum(jnp.abs(xt - tt))])
        sums = sums + tail

    return sums


class DiceLoss:
    """JAX/Pallas port of the PyTorch DiceLoss.forward."""

    def __init__(self, class_weights=None, verbose=False):
        # class_weights is stored but unused in forward (matches the PyTorch code).
        self.class_weights = class_weights
        # The torch forward prints (and thereby forces a device->host sync) every
        # call; gate it so the default fast path never blocks dispatch.
        self.verbose = verbose

    def __call__(self, input_, target):
        n_elems = input_.size  # true element count (masking excludes any padding)
        sums = _dice_sums(input_, target)
        intersection = sums[0]
        sum_i = sums[1]
        sum_t = sums[2]
        sum_abs = sums[3]

        smooth = jnp.float32(1.0)
        dice = (2.0 * intersection + smooth) / (sum_i + sum_t + smooth)
        dice_loss = 1.0 - dice

        if self.verbose:
            l1 = sum_abs / jnp.float32(n_elems)
            # Torch-parity side effect (forces a host sync, exactly like torch).
            print('IOU: %6f, soft dice: %6f, dice_loss: %6f, l1_loss: %6f' % (
                float(intersection), float(dice), float(dice_loss), float(l1)))
        return dice_loss


if __name__ == "__main__":
    key = jax.random.PRNGKey(0)
    k1, k2 = jax.random.split(key)

    B, C, H, W = 2, 4, 16, 16  # NCHW, flattened inside the loss
    x = jax.random.uniform(k1, (B, C, H, W), dtype=jnp.float32)
    t = (jax.random.uniform(k2, (B, C, H, W)) > 0.5).astype(jnp.float32)

    # deterministic class weights (unused by forward, kept for fidelity)
    class_weights = jnp.ones((C,), dtype=jnp.float32)

    loss_fn = DiceLoss(class_weights)          # verbose=False: no host-sync print
    loss = loss_fn(x, t)
    jax.block_until_ready(loss)

    # Pure-JAX reference check.
    iflat = x.reshape(-1).astype(jnp.float32)
    tflat = t.reshape(-1).astype(jnp.float32)
    inter = jnp.sum(iflat * tflat)
    dice_ref = (2.0 * inter + 1.0) / (iflat.sum() + tflat.sum() + 1.0)
    ref_loss = 1.0 - dice_ref
    assert jnp.allclose(loss, ref_loss, rtol=1e-5, atol=1e-6), (loss, ref_loss)

    # Also check the L1 path through the kernel sums.
    sums = _dice_sums(x, t)
    l1_ref = jnp.mean(jnp.abs(iflat - tflat))
    assert jnp.allclose(sums[3] / iflat.size, l1_ref, rtol=1e-5, atol=1e-6)

    print("KERNEL_OK")
</pallas_src>

<mosaic_0001>
module attributes {stable_mosaic.version = 11 : i64} {
  func.func @_dice_reduce_kernel(%arg0: i32, %arg1: i32, %arg2: memref<16x128xf32, #tpu.memory_space<vmem>>, %arg3: memref<16x128xf32, #tpu.memory_space<vmem>>, %arg4: memref<1x4x8x128xf32, #tpu.memory_space<vmem>>, %arg5: memref<4x8x128xf32, #tpu.memory_space<vmem>>) attributes {dimension_semantics = [#tpu.dimension_semantics<parallel>, #tpu.dimension_semantics<arbitrary>], iteration_bounds = array<i64: 1, 1>, scalar_prefetch = 0 : i64, scratch_operands = 1 : i64, tpu.core_type = #tpu.core_type<tc>, window_params = [{transform_indices = @transform_0, window_bounds = array<i64: 16, 128>}, {transform_indices = @transform_1, window_bounds = array<i64: 16, 128>}, {transform_indices = @transform_2, window_bounds = array<i64: 1, 4, 8, 128>}]} {
    %c0_i32 = arith.constant 0 : i32
    %0 = arith.cmpi eq, %arg1, %c0_i32 : i32
    %1 = arith.extui %0 : i1 to i32
    %c0_i32_0 = arith.constant 0 : i32
    %2 = arith.cmpi ne, %1, %c0_i32_0 : i32
    scf.if %2 {
      %cst_30 = arith.constant 0.000000e+00 : f32
      %43 = vector.broadcast %cst_30 : f32 to vector<4x8x128xf32>
      %c0_31 = arith.constant 0 : index
      %c0_32 = arith.constant 0 : index
      %c0_33 = arith.constant 0 : index
      %44 = vector.load %arg5[%c0_31, %c0_32, %c0_33] : memref<4x8x128xf32, #tpu.memory_space<vmem>>, vector<4x8x128xf32>
      tpu.vector_store %arg5[%c0_31, %c0_32, %c0_33], %43 {strides = array<i32>} : memref<4x8x128xf32, #tpu.memory_space<vmem>>, vector<4x8x128xf32>,
    } else {
    }
    %c0 = arith.constant 0 : index
    %c0_1 = arith.constant 0 : index
    %3 = vector.load %arg2[%c0, %c0_1] : memref<16x128xf32, #tpu.memory_space<vmem>>, vector<16x128xf32>
    %c0_2 = arith.constant 0 : index
    %c0_3 = arith.constant 0 : index
    %4 = vector.load %arg3[%c0_2, %c0_3] : memref<16x128xf32, #tpu.memory_space<vmem>>, vector<16x128xf32>
    %5 = arith.mulf %3, %4 : vector<16x128xf32>
    %6 = arith.subf %3, %4 : vector<16x128xf32>
    %7 = math.absf %6 : vector<16x128xf32>
    %c0_4 = arith.constant 0 : index
    %c0_5 = arith.constant 0 : index
    %c0_6 = arith.constant 0 : index
    %8 = vector.load %arg5[%c0_4, %c0_5, %c0_6] : memref<4x8x128xf32, #tpu.memory_space<vmem>>, vector<1x8x128xf32>
    %9 = vector.shape_cast %8 : vector<1x8x128xf32> to vector<8x128xf32>
    %10 = vector.shape_cast %5 : vector<16x128xf32> to vector<2x8x128xf32>
    %cst = arith.constant dense<0.000000e+00> : vector<8x128xf32>
    %11 = vector.multi_reduction <add>, %10, %cst [0] : vector<2x8x128xf32> to vector<8x128xf32>
    %12 = arith.addf %9, %11 : vector<8x128xf32>
    %c0_7 = arith.constant 0 : index
    %c0_8 = arith.constant 0 : index
    %c0_9 = arith.constant 0 : index
    %13 = vector.load %arg5[%c0_7, %c0_8, %c0_9] : memref<4x8x128xf32, #tpu.memory_space<vmem>>, vector<1x8x128xf32>
    %14 = vector.shape_cast %13 : vector<1x8x128xf32> to vector<8x128xf32>
    %15 = vector.shape_cast %12 : vector<8x128xf32> to vector<1x8x128xf32>
    tpu.vector_store %arg5[%c0_7, %c0_8, %c0_9], %15 {strides = array<i32>} : memref<4x8x128xf32, #tpu.memory_space<vmem>>, vector<1x8x128xf32>,
    %c1 = arith.constant 1 : index
    %c0_10 = arith.constant 0 : index
    %c0_11 = arith.constant 0 : index
    %16 = vector.load %arg5[%c1, %c0_10, %c0_11] : memref<4x8x128xf32, #tpu.memory_space<vmem>>, vector<1x8x128xf32>
    %17 = vector.shape_cast %16 : vector<1x8x128xf32> to vector<8x128xf32>
    %18 = vector.shape_cast %3 : vector<16x128xf32> to vector<2x8x128xf32>
    %cst_12 = arith.constant dense<0.000000e+00> : vector<8x128xf32>
    %19 = vector.multi_reduction <add>, %18, %cst_12 [0] : vector<2x8x128xf32> to vector<8x128xf32>
    %20 = arith.addf %17, %19 : vector<8x128xf32>
    %c1_13 = arith.constant 1 : index
    %c0_14 = arith.constant 0 : index
    %c0_15 = arith.constant 0 : index
    %21 = vector.load %arg5[%c1_13, %c0_14, %c0_15] : memref<4x8x128xf32, #tpu.memory_space<vmem>>, vector<1x8x128xf32>
    %22 = vector.shape_cast %21 : vector<1x8x128xf32> to vector<8x128xf32>
    %23 = vector.shape_cast %20 : vector<8x128xf32> to vector<1x8x128xf32>
    tpu.vector_store %arg5[%c1_13, %c0_14, %c0_15], %23 {strides = array<i32>} : memref<4x8x128xf32, #tpu.memory_space<vmem>>, vector<1x8x128xf32>,
    %c2 = arith.constant 2 : index
    %c0_16 = arith.constant 0 : index
    %c0_17 = arith.constant 0 : index
    %24 = vector.load %arg5[%c2, %c0_16, %c0_17] : memref<4x8x128xf32, #tpu.memory_space<vmem>>, vector<1x8x128xf32>
    %25 = vector.shape_cast %24 : vector<1x8x128xf32> to vector<8x128xf32>
    %26 = vector.shape_cast %4 : vector<16x128xf32> to vector<2x8x128xf32>
    %cst_18 = arith.constant dense<0.000000e+00> : vector<8x128xf32>
    %27 = vector.multi_reduction <add>, %26, %cst_18 [0] : vector<2x8x128xf32> to vector<8x128xf32>
    %28 = arith.addf %25, %27 : vector<8x128xf32>
    %c2_19 = arith.constant 2 : index
    %c0_20 = arith.constant 0 : index
    %c0_21 = arith.constant 0 : index
    %29 = vector.load %arg5[%c2_19, %c0_20, %c0_21] : memref<4x8x128xf32, #tpu.memory_space<vmem>>, vector<1x8x128xf32>
    %30 = vector.shape_cast %29 : vector<1x8x128xf32> to vector<8x128xf32>
    %31 = vector.shape_cast %28 : vector<8x128xf32> to vector<1x8x128xf32>
    tpu.vector_store %arg5[%c2_19, %c0_20, %c0_21], %31 {strides = array<i32>} : memref<4x8x128xf32, #tpu.memory_space<vmem>>, vector<1x8x128xf32>,
    %c3 = arith.constant 3 : index
    %c0_22 = arith.constant 0 : index
    %c0_23 = arith.constant 0 : index
    %32 = vector.load %arg5[%c3, %c0_22, %c0_23] : memref<4x8x128xf32, #tpu.memory_space<vmem>>, vector<1x8x128xf32>
    %33 = vector.shape_cast %32 : vector<1x8x128xf32> to vector<8x128xf32>
    %34 = vector.shape_cast %7 : vector<16x128xf32> to vector<2x8x128xf32>
    %cst_24 = arith.constant dense<0.000000e+00> : vector<8x128xf32>
    %35 = vector.multi_reduction <add>, %34, %cst_24 [0] : vector<2x8x128xf32> to vector<8x128xf32>
    %36 = arith.addf %33, %35 : vector<8x128xf32>
    %c3_25 = arith.constant 3 : index
    %c0_26 = arith.constant 0 : index
    %c0_27 = arith.constant 0 : index
    %37 = vector.load %arg5[%c3_25, %c0_26, %c0_27] : memref<4x8x128xf32, #tpu.memory_space<vmem>>, vector<1x8x128xf32>
    %38 = vector.shape_cast %37 : vector<1x8x128xf32> to vector<8x128xf32>
    %39 = vector.shape_cast %36 : vector<8x128xf32> to vector<1x8x128xf32>
    tpu.vector_store %arg5[%c3_25, %c0_26, %c0_27], %39 {strides = array<i32>} : memref<4x8x128xf32, #tpu.memory_space<vmem>>, vector<1x8x128xf32>,
    %c0_i32_28 = arith.constant 0 : i32
    %40 = arith.cmpi eq, %arg1, %c0_i32_28 : i32
    %41 = arith.extui %40 : i1 to i32
    %c0_i32_29 = arith.constant 0 : i32
    %42 = arith.cmpi ne, %41, %c0_i32_29 : i32
    scf.if %42 {
      %c0_30 = arith.constant 0 : index
      %c0_31 = arith.constant 0 : index
      %c0_32 = arith.constant 0 : index
      %43 = vector.load %arg5[%c0_30, %c0_31, %c0_32] : memref<4x8x128xf32, #tpu.memory_space<vmem>>, vector<4x8x128xf32>
      %c0_33 = arith.constant 0 : index
      %c0_34 = arith.constant 0 : index
      %c0_35 = arith.constant 0 : index
      %c0_36 = arith.constant 0 : index
      %44 = vector.load %arg4[%c0_33, %c0_34, %c0_35, %c0_36] : memref<1x4x8x128xf32, #tpu.memory_space<vmem>>, vector<1x4x8x128xf32>
      %45 = vector.shape_cast %44 : vector<1x4x8x128xf32> to vector<4x8x128xf32>
      %46 = vector.shape_cast %43 : vector<4x8x128xf32> to vector<1x4x8x128xf32>
      tpu.vector_store %arg4[%c0_33, %c0_34, %c0_35, %c0_36], %46 {strides = array<i32>} : memref<1x4x8x128xf32, #tpu.memory_space<vmem>>, vector<1x4x8x128xf32>,
    } else {
    }
    return
  }
  func.func @transform_0(%arg0: i32, %arg1: i32) -> (i32, i32) {
    %c1_i32 = arith.constant 1 : i32
    %0 = arith.muli %arg0, %c1_i32 : i32
    %1 = arith.addi %0, %arg1 : i32
    %c0_i32 = arith.constant 0 : i32
    %2 = arith.minsi %1, %c0_i32 : i32
    %c0_i32_0 = arith.constant 0 : i32
    %c0_i32_1 = arith.constant 0 : i32
    return %2, %c0_i32_0 : i32, i32
  }
  func.func @transform_1(%arg0: i32, %arg1: i32) -> (i32, i32) {
    %c1_i32 = arith.constant 1 : i32
    %0 = arith.muli %arg0, %c1_i32 : i32
    %1 = arith.addi %0, %arg1 : i32
    %c0_i32 = arith.constant 0 : i32
    %2 = arith.minsi %1, %c0_i32 : i32
    %c0_i32_0 = arith.constant 0 : i32
    %c0_i32_1 = arith.constant 0 : i32
    return %2, %c0_i32_0 : i32, i32
  }
  func.func @transform_2(%arg0: i32, %arg1: i32) -> (i32, i32, i32, i32) {
    %c0_i32 = arith.constant 0 : i32
    %c0_i32_0 = arith.constant 0 : i32
    %c0_i32_1 = arith.constant 0 : i32
    %c0_i32_2 = arith.constant 0 : i32
    return %arg0, %c0_i32, %c0_i32_0, %c0_i32_1 : i32, i32, i32, i32
  }
}

</mosaic_0001>

<llo_original>
// kernel: _dice_sums.1
$region0: #{_dice_sums.1}
  #allocation0 [shape = 'u32[]', space=smem, size = 0x4, offset = 0x4, fixed_abs, tag = 'smem constant byte address 0x4 - core index']
  #allocation1 [shape = 'u32[144,128]{1,0:T(1,128)}', space=vmem, size = 0x12000, scoped, tag = 'internal scratch']
  #allocation2 [shape = 'f32[4,8,128]{2,1,0:T(8,128)}', space=vmem, size = 0x4000, scoped, tag = 'scratch operand']
  %s0 = inlined_call_operand.vmem [shape: f32[16,128], index: 0, kind: input, shape index: {}]
  %s1 = inlined_call_operand.vmem [shape: f32[16,128], index: 1, kind: input, shape index: {}]
  %s2 = inlined_call_operand.vmem [shape: f32[1,4,8,128], index: 2, kind: output, shape index: {}]
  %s3 = sld [smem:[#allocation0]]
  $region26: #{_dice_sums.1} parent=0
    _
  %s5 = ssub.s32 1, %s3
  %s6 = scalar_select 0, %s5, %s3
  // Predicated region
  $region2: #{_dice_sums.1} parent=0 // pred_check
    _
  $region3: #{_dice_sums.1} parent=0 // pred_check_branch
    %8 = sbr.rel (0) target = $region5
  $region4: #{_dice_sums.1} parent=0 // pred_region
    %s9 = sadd.s32 0, 0
    %p10 = scmp.lt.s32.totalorder %s9, 0
    %s11 = scalar_select %p10, %s9, 0
    %s12 = smul.u32 2, %s11
    %p13 = scmp.lt.s32.totalorder %s12, 1
    %s14 = scalar_select %p13, %s12, 1
    %s15 = smul.addr %s14, 8
    %s16 = scalar_lea.vmem %s0, %s15
    %s17 = sadd.s32 0, 0
    %p18 = scmp.lt.s32.totalorder %s17, 0
    %s19 = scalar_select %p18, %s17, 0
    %s20 = smul.u32 2, %s19
  $region5: #{_dice_sums.1} parent=0 // pred_fallthru
    _
  // Predicated region
  $region6: #{_dice_sums.1} parent=0 // pred_check
    _
  $region7: #{_dice_sums.1} parent=0 // pred_check_branch
    %22 = sbr.rel (0) target = $region9
  $region8: #{_dice_sums.1} parent=0 // pred_region
    %s23 = sadd.s32 0, 0
    %p24 = scmp.lt.s32.totalorder %s23, 0
    %s25 = scalar_select %p24, %s23, 0
    %s26 = smul.u32 2, %s25
    %p27 = scmp.lt.s32.totalorder %s26, 1
    %s28 = scalar_select %p27, %s26, 1
    %s29 = smul.addr %s28, 8
    %s30 = scalar_lea.vmem %s1, %s29
    %s31 = sadd.s32 0, 0
    %p32 = scmp.lt.s32.totalorder %s31, 0
    %s33 = scalar_select %p32, %s31, 0
    %s34 = smul.u32 2, %s33
  $region9: #{_dice_sums.1} parent=0 // pred_fallthru
    _
  %s35 = sadd.s32 0, 0
  %p36 = scmp.lt.s32.totalorder %s35, 0
  %s37 = scalar_select %p36, %s35, 0
  %s38 = smul.u32 2, %s37
  %p39 = scmp.lt.s32.totalorder %s38, 1
  %s40 = scalar_select %p39, %s38, 1
  %s41 = smul.addr %s40, 8
  %s42 = scalar_lea.vmem %s0, %s41
  %s43 = sadd.s32 0, 0
  %p44 = scmp.lt.s32.totalorder %s43, 0
  %s45 = scalar_select %p44, %s43, 0
  %s46 = smul.u32 2, %s45
  %p47 = scmp.lt.s32.totalorder %s46, 1
  %s48 = scalar_select %p47, %s46, 1
  %s49 = smul.addr %s48, 8
  %s50 = scalar_lea.vmem %s1, %s49
  %s51 = sadd.s32 0, 0
  %p52 = scmp.lt.s32.totalorder %s51, 0
  %s53 = scalar_select %p52, %s51, 0
  %s54 = smul.u32 2, %s53
  %p55 = scmp.lt.s32.totalorder %s54, 1
  %s56 = scalar_select %p55, %s54, 1
  %s57 = smul.addr %s56, 8
  %s58 = scalar_lea.vmem %s0, %s57
  %s59 = sadd.s32 0, 0
  %p60 = scmp.lt.s32.totalorder %s59, 0
  %s61 = scalar_select %p60, %s59, 0
  %s62 = smul.u32 2, %s61
  %s63 = sadd.s32 0, 0
  %p64 = scmp.lt.s32.totalorder %s63, 0
  %s65 = scalar_select %p64, %s63, 0
  %s66 = smul.u32 2, %s65
  %p67 = scmp.lt.s32.totalorder %s66, 1
  %s68 = scalar_select %p67, %s66, 1
  %s69 = smul.addr %s68, 8
  %s70 = scalar_lea.vmem %s1, %s69
  %s71 = sadd.s32 0, 0
  %p72 = scmp.lt.s32.totalorder %s71, 0
  %s73 = scalar_select %p72, %s71, 0
  %s74 = smul.u32 2, %s73
  %p75 = scmp.eq.s32.totalorder 0, 0
  // Predicated region
  $region10: #{_dice_sums.1} parent=0 // pred_check
    %p76 = pneg %p75
  $region11: #{_dice_sums.1} parent=0 // pred_check_branch
    %78 = sbr.rel (%p76) target = $region13
  $region12: #{_dice_sums.1} parent=0 // pred_region
    %79 = vst [vmem:[#allocation2] sm:$0xff] 0.0
    %80 = vst [vmem:[#allocation2 + $0x8] sm:$0xff] 0.0
    %81 = vst [vmem:[#allocation2 + $0x10] sm:$0xff] 0.0
    %82 = vst [vmem:[#allocation2 + $0x18] sm:$0xff] 0.0
  $region13: #{_dice_sums.1} parent=0 // pred_fallthru
    _
  %v83 = vld [vmem:[%s58] sm:$0xff]
  %v84 = vld [vmem:[%s58 + $0x8] sm:$0xff]
  %v85 = vld [vmem:[%s70] sm:$0xff]
  %v86 = vld [vmem:[%s70 + $0x8] sm:$0xff]
  %v87 = vmul.f32 %v83, %v85
  %v88 = vmul.f32 %v84, %v86
  %v89 = vsub.f32 %v83, %v85
  %v90 = vsub.f32 %v84, %v86
  %v91 = vand.u32 2147483647, %v89
  %v92 = vand.u32 2147483647, %v90
  %v93 = vld [vmem:[#allocation2] sm:$0xff]
  %v94 = vadd.f32 %v87, %v88
  %v95 = vadd.f32 %v93, %v94
  %96 = vst [vmem:[#allocation2] sm:$0xff] %v95
  %s97 = scalar_lea.vmem [#allocation2], 8
  %v98 = vld [vmem:[%s97] sm:$0xff]
  %v99 = vadd.f32 %v83, %v84
  %v100 = vadd.f32 %v98, %v99
  %101 = vst [vmem:[%s97] sm:$0xff] %v100
  %s102 = scalar_lea.vmem [#allocation2], 16
  %v103 = vld [vmem:[%s102] sm:$0xff]
  %v104 = vadd.f32 %v85, %v86
  %v105 = vadd.f32 %v103, %v104
  %106 = vst [vmem:[%s102] sm:$0xff] %v105
  %s107 = scalar_lea.vmem [#allocation2], 24
  %v108 = vld [vmem:[%s107] sm:$0xff]
  %v109 = vadd.f32 %v91, %v92
  %v110 = vadd.f32 %v108, %v109
  %111 = vst [vmem:[%s107] sm:$0xff] %v110
  // Predicated region
  $region14: #{_dice_sums.1} parent=0 // pred_check
    %p112 = pneg %p75
  $region15: #{_dice_sums.1} parent=0 // pred_check_branch
    %114 = sbr.rel (%p112) target = $region17
  $region16: #{_dice_sums.1} parent=0 // pred_region
    %v115 = vld [vmem:[#allocation2] sm:$0xff]
    %v116 = vld [vmem:[#allocation2 + $0x8] sm:$0xff]
    %v117 = vld [vmem:[#allocation2 + $0x10] sm:$0xff]
    %v118 = vld [vmem:[#allocation2 + $0x18] sm:$0xff]
    %119 = vst [vmem:[%s2] sm:$0xff] %v115
    %120 = vst [vmem:[%s2 + $0x8] sm:$0xff] %v116
    %121 = vst [vmem:[%s2 + $0x10] sm:$0xff] %v117
    %122 = vst [vmem:[%s2 + $0x18] sm:$0xff] %v118
  $region17: #{_dice_sums.1} parent=0 // pred_fallthru
    _
  // Predicated region
  $region18: #{_dice_sums.1} parent=0 // pred_check
    _
  $region19: #{_dice_sums.1} parent=0 // pred_check_branch
    %124 = sbr.rel (0) target = $region21
  $region20: #{_dice_sums.1} parent=0 // pred_region
    _
  $region21: #{_dice_sums.1} parent=0 // pred_fallthru
    _
  // Predicated region
  $region22: #{_dice_sums.1} parent=0 // pred_check
    _
  $region23: #{_dice_sums.1} parent=0 // pred_check_branch
    %126 = sbr.rel (0) target = $region25
  $region24: #{_dice_sums.1} parent=0 // pred_region
    _
  $region25: #{_dice_sums.1} parent=0 // pred_fallthru
    _

</llo_original>
